<compile_context>
chip_gen: v6e
topology: v6e:2x2x1
jax: 0.10.0
libtpu: 0.0.40
codegen_flags: <defaults>
</compile_context>

<pallas_src>
import math

import jax
import jax.numpy as jnp
from jax.experimental import pallas as pl
from jax.experimental.pallas import tpu as pltpu


def _make_concat_kernel(ch_sizes):
    """Kernel copying each input tile into its (static) channel slab."""
    offsets = []
    off = 0
    for c in ch_sizes:
        offsets.append(off)
        off += c

    def kernel(*refs):
        out_ref = refs[-1]
        for r, o, c in zip(refs[:-1], offsets, ch_sizes):
            # Static slice store; lanes (last dim) are fully dense.
            out_ref[o:o + c, :] = r[...]

    return kernel


def _pick_inner_tile(inner, c_total, itemsize):
    """Largest lane-aligned tile of the inner axis that keeps VMEM bounded."""
    if inner % 128 != 0:
        # Must use the full (array-sized) dim to satisfy the (8,128) rule.
        return inner
    # ~8 MiB budget for all blocks (inputs + output, double-buffered) so the
    # same tiling works on v5e/v6e (128 MiB VMEM) and v7x (64 MiB).
    budget = 8 * 1024 * 1024
    max_cols = budget // max(1, 4 * c_total * itemsize)
    t = (max_cols // 128) * 128
    t = max(128, min(t, inner))
    while inner % t != 0:
        t -= 128
    return t


def concat(xs, dimension=1):
    """Pallas equivalent of torch.cat(xs, dim=dimension)."""
    xs = list(xs)
    assert len(xs) >= 1
    if len(xs) == 1:
        return xs[0]

    shape0 = xs[0].shape
    ndim = len(shape0)
    d = dimension % ndim
    dtype = xs[0].dtype
    for x in xs:
        assert x.dtype == dtype and len(x.shape) == ndim
        for ax in range(ndim):
            if ax != d:
                assert x.shape[ax] == shape0[ax]

    outer = int(math.prod(shape0[:d]))
    inner = int(math.prod(shape0[d + 1:]))
    ch_sizes = [int(x.shape[d]) for x in xs]
    c_total = sum(ch_sizes)

    # (outer, C_i, inner): concat axis on sublanes, flattened trailing dims on lanes.
    xs3 = [x.reshape(outer, c, inner) for x, c in zip(xs, ch_sizes)]

    t = _pick_inner_tile(inner, c_total, jnp.dtype(dtype).itemsize)
    n_inner = inner // t

    in_specs = [
        pl.BlockSpec((pl.Squeezed(), c, t), lambda n, s: (n, 0, s))
        for c in ch_sizes
    ]
    out_spec = pl.BlockSpec((pl.Squeezed(), c_total, t), lambda n, s: (n, 0, s))

    out = pl.pallas_call(
        _make_concat_kernel(ch_sizes),
        out_shape=jax.ShapeDtypeStruct((outer, c_total, inner), dtype),
        grid_spec=pltpu.PrefetchScalarGridSpec(
            num_scalar_prefetch=0,
            grid=(outer, n_inner),
            in_specs=in_specs,
            out_specs=out_spec,
        ),
        compiler_params=pltpu.CompilerParams(
            dimension_semantics=("parallel", "parallel"),
            vmem_limit_bytes=64 * 1024 * 1024,
        ),
    )(*xs3)

    out_shape = list(shape0)
    out_shape[d] = c_total
    return out.reshape(tuple(out_shape))


if __name__ == "__main__":
    key = jax.random.PRNGKey(0)
    k0, k1, k2, k3, k4, k5 = jax.random.split(key, 6)

    # SPPF-style usage: concat four (N, C, H, W) feature maps along channels.
    N, C, H, W = 2, 4, 16, 16
    xs = [jax.random.normal(k, (N, C, H, W), jnp.float32) for k in (k0, k1, k2, k3)]

    out = concat(xs, dimension=1)
    out = jax.block_until_ready(out)
    ref = jnp.concatenate(xs, axis=1)
    assert out.shape == (N, 4 * C, H, W), out.shape
    assert bool(jnp.all(out == ref))

    # Generic case: unequal channel counts.
    ya = jax.random.normal(k4, (N, 4, H, W), jnp.float32)
    yb = jax.random.normal(k5, (N, 8, H, W), jnp.float32)
    out2 = jax.block_until_ready(concat([ya, yb], dimension=1))
    ref2 = jnp.concatenate([ya, yb], axis=1)
    assert out2.shape == (N, 12, H, W), out2.shape
    assert bool(jnp.all(out2 == ref2))

    print("KERNEL_OK")
</pallas_src>

<mosaic_0001>
module attributes {stable_mosaic.version = 11 : i64} {
  func.func @kernel(%arg0: i32, %arg1: i32, %arg2: memref<1x4x256xf32, #tpu.memory_space<vmem>>, %arg3: memref<1x4x256xf32, #tpu.memory_space<vmem>>, %arg4: memref<1x4x256xf32, #tpu.memory_space<vmem>>, %arg5: memref<1x4x256xf32, #tpu.memory_space<vmem>>, %arg6: memref<1x16x256xf32, #tpu.memory_space<vmem>>) attributes {dimension_semantics = [#tpu.dimension_semantics<parallel>, #tpu.dimension_semantics<parallel>], iteration_bounds = array<i64: 2, 1>, scalar_prefetch = 0 : i64, scratch_operands = 0 : i64, tpu.core_type = #tpu.core_type<tc>, window_params = [{transform_indices = @transform_0, window_bounds = array<i64: 1, 4, 256>}, {transform_indices = @transform_1, window_bounds = array<i64: 1, 4, 256>}, {transform_indices = @transform_2, window_bounds = array<i64: 1, 4, 256>}, {transform_indices = @transform_3, window_bounds = array<i64: 1, 4, 256>}, {transform_indices = @transform_4, window_bounds = array<i64: 1, 16, 256>}]} {
    %c0 = arith.constant 0 : index
    %c0_0 = arith.constant 0 : index
    %c0_1 = arith.constant 0 : index
    %0 = vector.load %arg2[%c0, %c0_0, %c0_1] : memref<1x4x256xf32, #tpu.memory_space<vmem>>, vector<1x4x256xf32>
    %1 = vector.shape_cast %0 : vector<1x4x256xf32> to vector<4x256xf32>
    %c0_2 = arith.constant 0 : index
    %c0_3 = arith.constant 0 : index
    %c0_4 = arith.constant 0 : index
    %2 = vector.load %arg6[%c0_2, %c0_3, %c0_4] : memref<1x16x256xf32, #tpu.memory_space<vmem>>, vector<1x4x256xf32>
    %3 = vector.shape_cast %2 : vector<1x4x256xf32> to vector<4x256xf32>
    %4 = vector.shape_cast %1 : vector<4x256xf32> to vector<1x4x256xf32>
    tpu.vector_store %arg6[%c0_2, %c0_3, %c0_4], %4 {strides = array<i32>} : memref<1x16x256xf32, #tpu.memory_space<vmem>>, vector<1x4x256xf32>,
    %c0_5 = arith.constant 0 : index
    %c0_6 = arith.constant 0 : index
    %c0_7 = arith.constant 0 : index
    %5 = vector.load %arg3[%c0_5, %c0_6, %c0_7] : memref<1x4x256xf32, #tpu.memory_space<vmem>>, vector<1x4x256xf32>
    %6 = vector.shape_cast %5 : vector<1x4x256xf32> to vector<4x256xf32>
    %c0_8 = arith.constant 0 : index
    %c4 = arith.constant 4 : index
    %c0_9 = arith.constant 0 : index
    %7 = vector.load %arg6[%c0_8, %c4, %c0_9] : memref<1x16x256xf32, #tpu.memory_space<vmem>>, vector<1x4x256xf32>
    %8 = vector.shape_cast %7 : vector<1x4x256xf32> to vector<4x256xf32>
    %9 = vector.shape_cast %6 : vector<4x256xf32> to vector<1x4x256xf32>
    tpu.vector_store %arg6[%c0_8, %c4, %c0_9], %9 {strides = array<i32>} : memref<1x16x256xf32, #tpu.memory_space<vmem>>, vector<1x4x256xf32>,
    %c0_10 = arith.constant 0 : index
    %c0_11 = arith.constant 0 : index
    %c0_12 = arith.constant 0 : index
    %10 = vector.load %arg4[%c0_10, %c0_11, %c0_12] : memref<1x4x256xf32, #tpu.memory_space<vmem>>, vector<1x4x256xf32>
    %11 = vector.shape_cast %10 : vector<1x4x256xf32> to vector<4x256xf32>
    %c0_13 = arith.constant 0 : index
    %c8 = arith.constant 8 : index
    %c0_14 = arith.constant 0 : index
    %12 = vector.load %arg6[%c0_13, %c8, %c0_14] : memref<1x16x256xf32, #tpu.memory_space<vmem>>, vector<1x4x256xf32>
    %13 = vector.shape_cast %12 : vector<1x4x256xf32> to vector<4x256xf32>
    %14 = vector.shape_cast %11 : vector<4x256xf32> to vector<1x4x256xf32>
    tpu.vector_store %arg6[%c0_13, %c8, %c0_14], %14 {strides = array<i32>} : memref<1x16x256xf32, #tpu.memory_space<vmem>>, vector<1x4x256xf32>,
    %c0_15 = arith.constant 0 : index
    %c0_16 = arith.constant 0 : index
    %c0_17 = arith.constant 0 : index
    %15 = vector.load %arg5[%c0_15, %c0_16, %c0_17] : memref<1x4x256xf32, #tpu.memory_space<vmem>>, vector<1x4x256xf32>
    %16 = vector.shape_cast %15 : vector<1x4x256xf32> to vector<4x256xf32>
    %c0_18 = arith.constant 0 : index
    %c12 = arith.constant 12 : index
    %c0_19 = arith.constant 0 : index
    %17 = vector.load %arg6[%c0_18, %c12, %c0_19] : memref<1x16x256xf32, #tpu.memory_space<vmem>>, vector<1x4x256xf32>
    %18 = vector.shape_cast %17 : vector<1x4x256xf32> to vector<4x256xf32>
    %19 = vector.shape_cast %16 : vector<4x256xf32> to vector<1x4x256xf32>
    tpu.vector_store %arg6[%c0_18, %c12, %c0_19], %19 {strides = array<i32>} : memref<1x16x256xf32, #tpu.memory_space<vmem>>, vector<1x4x256xf32>,
    return
  }
  func.func @transform_0(%arg0: i32, %arg1: i32) -> (i32, i32, i32) {
    %c0_i32 = arith.constant 0 : i32
    %c0_i32_0 = arith.constant 0 : i32
    return %arg0, %c0_i32, %arg1 : i32, i32, i32
  }
  func.func @transform_1(%arg0: i32, %arg1: i32) -> (i32, i32, i32) {
    %c0_i32 = arith.constant 0 : i32
    %c0_i32_0 = arith.constant 0 : i32
    return %arg0, %c0_i32, %arg1 : i32, i32, i32
  }
  func.func @transform_2(%arg0: i32, %arg1: i32) -> (i32, i32, i32) {
    %c0_i32 = arith.constant 0 : i32
    %c0_i32_0 = arith.constant 0 : i32
    return %arg0, %c0_i32, %arg1 : i32, i32, i32
  }
  func.func @transform_3(%arg0: i32, %arg1: i32) -> (i32, i32, i32) {
    %c0_i32 = arith.constant 0 : i32
    %c0_i32_0 = arith.constant 0 : i32
    return %arg0, %c0_i32, %arg1 : i32, i32, i32
  }
  func.func @transform_4(%arg0: i32, %arg1: i32) -> (i32, i32, i32) {
    %c0_i32 = arith.constant 0 : i32
    %c0_i32_0 = arith.constant 0 : i32
    return %arg0, %c0_i32, %arg1 : i32, i32, i32
  }
}

</mosaic_0001>

<llo_original>
// kernel: tpu_custom_call.1
$region0: #{tpu_custom_call.1}
  #allocation0 [shape = 'u32[]', space=smem, size = 0x4, offset = 0x4, fixed_abs, tag = 'smem constant byte address 0x4 - core index']
  #allocation1 [shape = 'u32[144,128]{1,0:T(1,128)}', space=vmem, size = 0x12000, scoped, tag = 'internal scratch']
  %s0 = inlined_call_operand.hbm [shape: f32[2,4,256], index: 0, kind: input, shape index: {}]
  %s1 = inlined_call_operand.hbm [shape: f32[2,4,256], index: 1, kind: input, shape index: {}]
  %s2 = inlined_call_operand.hbm [shape: f32[2,4,256], index: 2, kind: input, shape index: {}]
  %s3 = inlined_call_operand.hbm [shape: f32[2,4,256], index: 3, kind: input, shape index: {}]
  %s4 = inlined_call_operand.hbm [shape: f32[2,16,256], index: 4, kind: output, shape index: {}]
  %s5 = sld [smem:[#allocation0]]
  $region65: #{tpu_custom_call.1} parent=0
    _
  %s7 = ssub.s32 1, %s5
  %s8 = scalar_select 0, %s7, %s5
  $region1: #{tpu_custom_call.1} parent=0
    #allocation2 [shape = 'u8[8192]{0}', space=vmem, size = 0x2000, scoped, tag = 'input window, operand 0']
    #allocation3 [shape = 's32[2]{0}', space=sflag, size = 0x8, scoped, tag = 'scoped memory for tpu_custom_call.1']
    #allocation4 [shape = 's32[2]{0}', space=sflag, size = 0x8, scoped, tag = 'scoped memory for tpu_custom_call.1']
    #allocation5 [shape = 'u8[8192]{0}', space=vmem, size = 0x2000, scoped, tag = 'input window, operand 1']
    #allocation6 [shape = 's32[2]{0}', space=sflag, size = 0x8, scoped, tag = 'scoped memory for tpu_custom_call.1']
    #allocation7 [shape = 'u8[8192]{0}', space=vmem, size = 0x2000, scoped, tag = 'input window, operand 2']
    #allocation8 [shape = 'u8[8192]{0}', space=vmem, size = 0x2000, scoped, tag = 'input window, operand 3']
    #allocation9 [shape = 's32[2]{0}', space=sflag, size = 0x8, scoped, tag = 'scoped memory for tpu_custom_call.1']
    #allocation10 [shape = 'u8[32768]{0}', space=vmem, size = 0x8000, scoped, tag = 'output window, operand 0']
    %9 = vsyncpa [#allocation3], 0
    %s10 = scalar_lea.sflag [#allocation3], 1
    %11 = vsyncpa %s10, 0
    %12 = vsyncpa [#allocation6], 0
    %s13 = scalar_lea.sflag [#allocation6], 1
    %14 = vsyncpa %s13, 0
    %15 = vsyncpa [#allocation9], 0
    %s16 = scalar_lea.sflag [#allocation9], 1
    %17 = vsyncpa %s16, 0
    %18 = vsyncpa [#allocation4], 0
    %s19 = scalar_lea.sflag [#allocation4], 1
    %20 = vsyncpa %s19, 0
    loop: start=0, step=1, limit=4
    $region2: #{tpu_custom_call.1} parent=1 // loop_pre_header
      _
    $region3: #{tpu_custom_call.1} parent=1 // loop_header
      %s22 = sphi 0, %s26
      %p23 = scmp.ge.s32.totalorder %s22, 4
      %s29 = sphi 0, %s41
      %s30 = sphi 0, %s37
      %s31 = sphi 0, %s29
      %s32 = sphi 0, %s30
      %s33 = sphi 0, %s31
      %s34 = sphi 0, %s32
      %s46 = sphi 0, %s48
      %s49 = sphi 0, %s46
      %s50 = sphi 0, %s49
      %s66 = sphi 0, %s50
      %s74 = sphi 0, %s76
      %s77 = sphi 0, %s74
      %s78 = sphi 0, %s77
      %s94 = sphi 0, %s78
      %s102 = sphi 0, %s104
      %s105 = sphi 0, %s102
      %s106 = sphi 0, %s105
      %s122 = sphi 0, %s106
      %s130 = sphi 0, %s132
      %s133 = sphi 0, %s130
      %s134 = sphi 0, %s133
      %s150 = sphi 0, %s134
      %s158 = sphi 0, %s160
      %s161 = sphi 0, %s158
      %s162 = sphi 0, %s161
      %s178 = sphi 0, %s162
    $region4: #{tpu_custom_call.1} parent=1 // loop_header_branch
      %25 = sbr.rel (%p23) target = $region8
    $region5: #{tpu_custom_call.1} parent=1 // loop_body
      %s27 = ssub.s32 %s22, 1
      %s28 = ssub.s32 %s22, 2
      %s35 = sadd.s32 1, %s30
      %p36 = scmp.ge.s32.totalorder %s35, 1
      %s37 = scalar_select %p36, 0, %s35
      %s38 = sadd.s32 1, %s29
      %s39 = scalar_select %p36, %s38, %s29
      %p40 = scmp.ge.s32.totalorder %s39, 2
      %s41 = scalar_select %p40, 0, %s39
      %s42 = ssub.s32 %s29, %s41
      %s43 = ssub.s32 %s30, %s37
      %s44 = sor.u32 %s42, %s43
      %p45 = scmp.eq.s32.totalorder %s44, 0
      %s47 = sadd.s32 %s46, 1
      %s48 = scalar_select %p45, %s46, %s47
      %p51 = pneg %p45
      %p52 = scmp.eq.s32.totalorder %s22, 1
      %p53 = por %p51, %p52
      %p54 = scmp.ne.s32.totalorder %s46, %s49
      %p55 = scmp.eq.s32.totalorder %s22, 0
      %p56 = por %p54, %p55
      %p57 = scmp.ne.s32.totalorder %s46, %s49
      %p58 = scmp.eq.s32.totalorder %s27, 1
      %p59 = por %p57, %p58
      %p60 = scmp.ne.s32.totalorder %s49, %s50
      %p61 = scmp.eq.s32.totalorder %s27, 0
      %p62 = por %p60, %p61
      %p63 = scmp.ne.s32.totalorder %s49, %s50
      %p64 = scmp.eq.s32.totalorder %s28, 1
      %p65 = por %p63, %p64
      %p67 = scmp.ne.s32.totalorder %s50, %s66
      %p68 = scmp.eq.s32.totalorder %s28, 0
      %p69 = por %p67, %p68
      %s70 = ssub.s32 %s29, %s41
      %s71 = ssub.s32 %s30, %s37
      %s72 = sor.u32 %s70, %s71
      %p73 = scmp.eq.s32.totalorder %s72, 0
      %s75 = sadd.s32 %s74, 1
      %s76 = scalar_select %p73, %s74, %s75
      %p79 = pneg %p73
      %p80 = scmp.eq.s32.totalorder %s22, 1
      %p81 = por %p79, %p80
      %p82 = scmp.ne.s32.totalorder %s74, %s77
      %p83 = scmp.eq.s32.totalorder %s22, 0
      %p84 = por %p82, %p83
      %p85 = scmp.ne.s32.totalorder %s74, %s77
      %p86 = scmp.eq.s32.totalorder %s27, 1
      %p87 = por %p85, %p86
      %p88 = scmp.ne.s32.totalorder %s77, %s78
      %p89 = scmp.eq.s32.totalorder %s27, 0
      %p90 = por %p88, %p89
      %p91 = scmp.ne.s32.totalorder %s77, %s78
      %p92 = scmp.eq.s32.totalorder %s28, 1
      %p93 = por %p91, %p92
      %p95 = scmp.ne.s32.totalorder %s78, %s94
      %p96 = scmp.eq.s32.totalorder %s28, 0
      %p97 = por %p95, %p96
      %s98 = ssub.s32 %s29, %s41
      %s99 = ssub.s32 %s30, %s37
      %s100 = sor.u32 %s98, %s99
      %p101 = scmp.eq.s32.totalorder %s100, 0
      %s103 = sadd.s32 %s102, 1
      %s104 = scalar_select %p101, %s102, %s103
      %p107 = pneg %p101
      %p108 = scmp.eq.s32.totalorder %s22, 1
      %p109 = por %p107, %p108
      %p110 = scmp.ne.s32.totalorder %s102, %s105
      %p111 = scmp.eq.s32.totalorder %s22, 0
      %p112 = por %p110, %p111
      %p113 = scmp.ne.s32.totalorder %s102, %s105
      %p114 = scmp.eq.s32.totalorder %s27, 1
      %p115 = por %p113, %p114
      %p116 = scmp.ne.s32.totalorder %s105, %s106
      %p117 = scmp.eq.s32.totalorder %s27, 0
      %p118 = por %p116, %p117
      %p119 = scmp.ne.s32.totalorder %s105, %s106
      %p120 = scmp.eq.s32.totalorder %s28, 1
      %p121 = por %p119, %p120
      %p123 = scmp.ne.s32.totalorder %s106, %s122
      %p124 = scmp.eq.s32.totalorder %s28, 0
      %p125 = por %p123, %p124
      %s126 = ssub.s32 %s29, %s41
      %s127 = ssub.s32 %s30, %s37
      %s128 = sor.u32 %s126, %s127
      %p129 = scmp.eq.s32.totalorder %s128, 0
      %s131 = sadd.s32 %s130, 1
      %s132 = scalar_select %p129, %s130, %s131
      %p135 = pneg %p129
      %p136 = scmp.eq.s32.totalorder %s22, 1
      %p137 = por %p135, %p136
      %p138 = scmp.ne.s32.totalorder %s130, %s133
      %p139 = scmp.eq.s32.totalorder %s22, 0
      %p140 = por %p138, %p139
      %p141 = scmp.ne.s32.totalorder %s130, %s133
      %p142 = scmp.eq.s32.totalorder %s27, 1
      %p143 = por %p141, %p142
      %p144 = scmp.ne.s32.totalorder %s133, %s134
      %p145 = scmp.eq.s32.totalorder %s27, 0
      %p146 = por %p144, %p145
      %p147 = scmp.ne.s32.totalorder %s133, %s134
      %p148 = scmp.eq.s32.totalorder %s28, 1
      %p149 = por %p147, %p148
      %p151 = scmp.ne.s32.totalorder %s134, %s150
      %p152 = scmp.eq.s32.totalorder %s28, 0
      %p153 = por %p151, %p152
      %s154 = ssub.s32 %s29, %s41
      %s155 = ssub.s32 %s30, %s37
      %s156 = sor.u32 %s154, %s155
      %p157 = scmp.eq.s32.totalorder %s156, 0
      %s159 = sadd.s32 %s158, 1
      %s160 = scalar_select %p157, %s158, %s159
      %p163 = pneg %p157
      %p164 = scmp.eq.s32.totalorder %s22, 1
      %p165 = por %p163, %p164
      %p166 = scmp.ne.s32.totalorder %s158, %s161
      %p167 = scmp.eq.s32.totalorder %s22, 0
      %p168 = por %p166, %p167
      %p169 = scmp.ne.s32.totalorder %s158, %s161
      %p170 = scmp.eq.s32.totalorder %s27, 1
      %p171 = por %p169, %p170
      %p172 = scmp.ne.s32.totalorder %s161, %s162
      %p173 = scmp.eq.s32.totalorder %s27, 0
      %p174 = por %p172, %p173
      %p175 = scmp.ne.s32.totalorder %s161, %s162
      %p176 = scmp.eq.s32.totalorder %s28, 1
      %p177 = por %p175, %p176
      %p179 = scmp.ne.s32.totalorder %s162, %s178
      %p180 = scmp.eq.s32.totalorder %s28, 0
      %p181 = por %p179, %p180
      %p182 = scmp.le.s32.totalorder 1, %s22
      %p183 = scmp.lt.s32.totalorder %s22, 3
      %p184 = pnand %p182, %p183
      %p185 = pneg %p184
      // Predicated region
      $region9: #{tpu_custom_call.1} parent=5 // pred_check
        _
      $region10: #{tpu_custom_call.1} parent=5 // pred_check_branch
        %187 = sbr.rel (%p184) target = $region12
      $region11: #{tpu_custom_call.1} parent=5 // pred_region
        %s188 = ssub.s32 %s22, 1
      $region12: #{tpu_custom_call.1} parent=5 // pred_fallthru
        _
      %p189 = scmp.lt.s32.totalorder %s22, 2
      // Predicated region
      $region13: #{tpu_custom_call.1} parent=5 // pred_check
        %p190 = pneg %p189
      $region14: #{tpu_custom_call.1} parent=5 // pred_check_branch
        %192 = sbr.rel (%p190) target = $region16
      $region15: #{tpu_custom_call.1} parent=5 // pred_region
        // Predicated region
        $region17: #{tpu_custom_call.1} parent=15 // pred_check
          %p193 = pneg %p56
        $region18: #{tpu_custom_call.1} parent=15 // pred_check_branch
          %195 = sbr.rel (%p193) target = $region20
        $region19: #{tpu_custom_call.1} parent=15 // pred_region
          %s196 = sand.u32 %s46, 1
          %s197 = scalar_lea.sflag [#allocation3], %s196
          %s198 = sand.u32 %s46, 1
          %s199 = smul.addr %s198, 8
          %s200 = scalar_lea.vmem [#allocation2], %s199
          %s201 = smul.u32 2, %s30
          %s203 = ssub.s32 128, 128
          %204 = vsyncadd %s197, %s203
          %s205 = smul.addr %s29, 2
          %s206 = sadd.s32 %s201, %s205
          %s207 = smul.addr %s206, 64
          %s208 = scalar_lea.hbm %s0, %s207
          %s210 = sshll.u32 %s200, 4
          %s211 = int_to_ptr.vmem [resolvable:$true] %s210
          %213 = dma.hbm_to_vmem [thread:$0]  %s208, 128, %s211, %s197
        $region20: #{tpu_custom_call.1} parent=15 // pred_fallthru
          _
        // Predicated region
        $region21: #{tpu_custom_call.1} parent=15 // pred_check
          %p214 = pneg %p84
        $region22: #{tpu_custom_call.1} parent=15 // pred_check_branch
          %216 = sbr.rel (%p214) target = $region24
        $region23: #{tpu_custom_call.1} parent=15 // pred_region
          %s217 = sand.u32 %s22, 1
          %s218 = scalar_lea.sflag [#allocation6], %s217
          %s219 = sand.u32 %s74, 1
          %s220 = smul.addr %s219, 8
          %s221 = scalar_lea.vmem [#allocation5], %s220
          %s222 = smul.u32 2, %s30
          %s224 = ssub.s32 128, 128
          %225 = vsyncadd %s218, %s224
          %s226 = smul.addr %s29, 2
          %s227 = sadd.s32 %s222, %s226
          %s228 = smul.addr %s227, 64
          %s229 = scalar_lea.hbm %s1, %s228
          %s231 = sshll.u32 %s221, 4
          %s232 = int_to_ptr.vmem [resolvable:$true] %s231
          %234 = dma.hbm_to_vmem [thread:$0]  %s229, 128, %s232, %s218
        $region24: #{tpu_custom_call.1} parent=15 // pred_fallthru
          _
        // Predicated region
        $region25: #{tpu_custom_call.1} parent=15 // pred_check
          %p235 = pneg %p112
        $region26: #{tpu_custom_call.1} parent=15 // pred_check_branch
          %237 = sbr.rel (%p235) target = $region28
        $region27: #{tpu_custom_call.1} parent=15 // pred_region
          %s238 = sand.u32 %s22, 1
          %s239 = scalar_lea.sflag [#allocation6], %s238
          %s240 = sand.u32 %s102, 1
          %s241 = smul.addr %s240, 8
          %s242 = scalar_lea.vmem [#allocation7], %s241
          %s243 = smul.u32 2, %s30
          %s245 = ssub.s32 128, 128
          %246 = vsyncadd %s239, %s245
          %s247 = smul.addr %s29, 2
          %s248 = sadd.s32 %s243, %s247
          %s249 = smul.addr %s248, 64
          %s250 = scalar_lea.hbm %s2, %s249
          %s252 = sshll.u32 %s242, 4
          %s253 = int_to_ptr.vmem [resolvable:$true] %s252
          %255 = dma.hbm_to_vmem [thread:$0]  %s250, 128, %s253, %s239
        $region28: #{tpu_custom_call.1} parent=15 // pred_fallthru
          _
        // Predicated region
        $region29: #{tpu_custom_call.1} parent=15 // pred_check
          %p256 = pneg %p140
        $region30: #{tpu_custom_call.1} parent=15 // pred_check_branch
          %258 = sbr.rel (%p256) target = $region32
        $region31: #{tpu_custom_call.1} parent=15 // pred_region
          %s259 = sand.u32 %s130, 1
          %s260 = scalar_lea.sflag [#allocation9], %s259
          %s261 = sand.u32 %s130, 1
          %s262 = smul.addr %s261, 8
          %s263 = scalar_lea.vmem [#allocation8], %s262
          %s264 = smul.u32 2, %s30
          %s266 = ssub.s32 128, 128
          %267 = vsyncadd %s260, %s266
          %s268 = smul.addr %s29, 2
          %s269 = sadd.s32 %s264, %s268
          %s270 = smul.addr %s269, 64
          %s271 = scalar_lea.hbm %s3, %s270
          %s273 = sshll.u32 %s263, 4
          %s274 = int_to_ptr.vmem [resolvable:$true] %s273
          %276 = dma.hbm_to_vmem [thread:$0]  %s271, 128, %s274, %s260
        $region32: #{tpu_custom_call.1} parent=15 // pred_fallthru
          _
      $region16: #{tpu_custom_call.1} parent=5 // pred_fallthru
        _
      %p277 = scmp.le.s32.totalorder 1, %s22
      %p278 = scmp.lt.s32.totalorder %s22, 3
      %p279 = pnand %p277, %p278
      %p280 = pneg %p279
      // Predicated region
      $region33: #{tpu_custom_call.1} parent=5 // pred_check
        _
      $region34: #{tpu_custom_call.1} parent=5 // pred_check_branch
        %282 = sbr.rel (%p279) target = $region36
      $region35: #{tpu_custom_call.1} parent=5 // pred_region
        %s283 = ssub.s32 %s22, 1
        %s284 = sand.u32 %s49, 1
        %s285 = scalar_lea.sflag [#allocation3], %s284
        %s286 = sand.u32 %s49, 1
        %s287 = smul.addr %s286, 8
        %s288 = scalar_lea.vmem [#allocation2], %s287
        // Predicated region
        $region37: #{tpu_custom_call.1} parent=35 // pred_check
          %p289 = pneg %p62
        $region38: #{tpu_custom_call.1} parent=35 // pred_check_branch
          %291 = sbr.rel (%p289) target = $region40
        $region39: #{tpu_custom_call.1} parent=35 // pred_region
          %292 = dma.done %s285, 128
        $region40: #{tpu_custom_call.1} parent=35 // pred_fallthru
          _
        %s293 = sand.u32 %s27, 1
        %s294 = scalar_lea.sflag [#allocation6], %s293
        %s295 = sand.u32 %s77, 1
        %s296 = smul.addr %s295, 8
        %s297 = scalar_lea.vmem [#allocation5], %s296
        // Predicated region
        $region41: #{tpu_custom_call.1} parent=35 // pred_check
          %p298 = pneg %p90
        $region42: #{tpu_custom_call.1} parent=35 // pred_check_branch
          %300 = sbr.rel (%p298) target = $region44
        $region43: #{tpu_custom_call.1} parent=35 // pred_region
          %301 = dma.done %s294, 128
        $region44: #{tpu_custom_call.1} parent=35 // pred_fallthru
          _
        %s302 = sand.u32 %s27, 1
        %s303 = scalar_lea.sflag [#allocation6], %s302
        %s304 = sand.u32 %s105, 1
        %s305 = smul.addr %s304, 8
        %s306 = scalar_lea.vmem [#allocation7], %s305
        // Predicated region
        $region45: #{tpu_custom_call.1} parent=35 // pred_check
          %p307 = pneg %p118
        $region46: #{tpu_custom_call.1} parent=35 // pred_check_branch
          %309 = sbr.rel (%p307) target = $region48
        $region47: #{tpu_custom_call.1} parent=35 // pred_region
          %310 = dma.done %s303, 128
        $region48: #{tpu_custom_call.1} parent=35 // pred_fallthru
          _
        %s311 = sand.u32 %s133, 1
        %s312 = scalar_lea.sflag [#allocation9], %s311
        %s313 = sand.u32 %s133, 1
        %s314 = smul.addr %s313, 8
        %s315 = scalar_lea.vmem [#allocation8], %s314
        // Predicated region
        $region49: #{tpu_custom_call.1} parent=35 // pred_check
          %p316 = pneg %p146
        $region50: #{tpu_custom_call.1} parent=35 // pred_check_branch
          %318 = sbr.rel (%p316) target = $region52
        $region51: #{tpu_custom_call.1} parent=35 // pred_region
          %319 = dma.done %s312, 128
        $region52: #{tpu_custom_call.1} parent=35 // pred_fallthru
          _
        %s320 = sand.u32 %s49, 1
        %s321 = scalar_lea.sflag [#allocation3], %s320
        %s322 = sand.u32 %s49, 1
        %s323 = smul.addr %s322, 8
        %s324 = scalar_lea.vmem [#allocation2], %s323
        %p325 = pneg %p62
        %p326 = pneg %p59
        %s327 = sand.u32 %s27, 1
        %s328 = scalar_lea.sflag [#allocation6], %s327
        %s329 = sand.u32 %s77, 1
        %s330 = smul.addr %s329, 8
        %s331 = scalar_lea.vmem [#allocation5], %s330
        %p332 = pneg %p90
        %p333 = pneg %p87
        %s334 = sand.u32 %s27, 1
        %s335 = scalar_lea.sflag [#allocation6], %s334
        %s336 = sand.u32 %s105, 1
        %s337 = smul.addr %s336, 8
        %s338 = scalar_lea.vmem [#allocation7], %s337
        %p339 = pneg %p118
        %p340 = pneg %p115
        %s341 = sand.u32 %s133, 1
        %s342 = scalar_lea.sflag [#allocation9], %s341
        %s343 = sand.u32 %s133, 1
        %s344 = smul.addr %s343, 8
        %s345 = scalar_lea.vmem [#allocation8], %s344
        %p346 = pneg %p146
        %p347 = pneg %p143
        %p348 = pneg %p174
        %p349 = pneg %p171
        %s350 = sand.u32 %s161, 1
        %s351 = scalar_lea.sflag [#allocation4], %s350
        %s352 = sand.u32 %s161, 1
        %s353 = smul.addr %s352, 32
        %s354 = scalar_lea.vmem [#allocation10], %s353
        %s355 = smul.u32 2, %s32
        %s356 = smul.u32 2, %s32
        %s357 = smul.u32 2, %s32
        %s358 = smul.u32 2, %s32
        %s359 = smul.u32 2, %s32
        %v360 = vld [vmem:[%s288] sm:$0xff]
        %v362 = vcombine.high %v360, %v360
        %364 = vst [vmem:[%s354] sm:$0xf] %v360
        %365 = vst [vmem:[%s354 + $0x8] sm:$0xf] %v362
        %v366 = vld [vmem:[%s297] sm:$0xff]
        %v368 = vcombine.low %v366, %v366
        %370 = vst [vmem:[%s354] sm:$0xf0] %v368
        %371 = vst [vmem:[%s354 + $0x8] sm:$0xf0] %v366
        %v372 = vld [vmem:[%s306] sm:$0xff]
        %v374 = vcombine.high %v372, %v372
        %376 = vst [vmem:[%s354 + $0x10] sm:$0xf] %v372
        %377 = vst [vmem:[%s354 + $0x18] sm:$0xf] %v374
        %v378 = vld [vmem:[%s315] sm:$0xff]
        %v380 = vcombine.low %v378, %v378
        %382 = vst [vmem:[%s354 + $0x10] sm:$0xf0] %v380
        %383 = vst [vmem:[%s354 + $0x18] sm:$0xf0] %v378
        %s384 = sand.u32 %s161, 1
        %s385 = scalar_lea.sflag [#allocation4], %s384
        %s386 = sand.u32 %s161, 1
        %s387 = smul.addr %s386, 32
        %s388 = scalar_lea.vmem [#allocation10], %s387
        // Predicated region
        $region53: #{tpu_custom_call.1} parent=35 // pred_check
          %p389 = pneg %p171
        $region54: #{tpu_custom_call.1} parent=35 // pred_check_branch
          %391 = sbr.rel (%p389) target = $region56
        $region55: #{tpu_custom_call.1} parent=35 // pred_region
          %s392 = smul.u32 2, %s32
          %s394 = ssub.s32 512, 512
          %395 = vsyncadd %s385, %s394
          %s396 = smul.addr %s31, 4
          %s397 = sadd.s32 %s392, %s396
          %s398 = smul.addr %s397, 128
          %s399 = scalar_lea.hbm %s4, %s398
          %s400 = sshll.u32 %s388, 4
          %s401 = int_to_ptr.vmem [resolvable:$true] %s400
          %406 = dma.vmem_to_hbm [thread:$0]  %s401, 512, %s399, %s385, 256, 256, 16
        $region56: #{tpu_custom_call.1} parent=35 // pred_fallthru
          _
      $region36: #{tpu_custom_call.1} parent=5 // pred_fallthru
        _
      %p407 = scmp.le.s32.totalorder 2, %s22
      // Predicated region
      $region57: #{tpu_custom_call.1} parent=5 // pred_check
        %p408 = pneg %p407
      $region58: #{tpu_custom_call.1} parent=5 // pred_check_branch
        %410 = sbr.rel (%p408) target = $region60
      $region59: #{tpu_custom_call.1} parent=5 // pred_region
        %s411 = ssub.s32 %s22, 2
        // Predicated region
        $region61: #{tpu_custom_call.1} parent=59 // pred_check
          %p412 = pneg %p177
        $region62: #{tpu_custom_call.1} parent=59 // pred_check_branch
          %414 = sbr.rel (%p412) target = $region64
        $region63: #{tpu_custom_call.1} parent=59 // pred_region
          %s415 = sand.u32 %s162, 1
          %s416 = scalar_lea.sflag [#allocation4], %s415
          %s417 = sand.u32 %s162, 1
          %s418 = smul.addr %s417, 32
          %s419 = scalar_lea.vmem [#allocation10], %s418
          %420 = dma.done %s416, 512
        $region64: #{tpu_custom_call.1} parent=59 // pred_fallthru
          _
      $region60: #{tpu_custom_call.1} parent=5 // pred_fallthru
        _
    $region6: #{tpu_custom_call.1} parent=1 // loop_footer
      %s26 = sadd.s32 1, %s22
    $region7: #{tpu_custom_call.1} parent=1 // loop_footer_branch
      %21 = sbr.rel target = $region3
    $region8: #{tpu_custom_call.1} parent=1 // loop_exit
      _
    %421 = vsyncpa [#allocation3], 1
    %s422 = scalar_lea.sflag [#allocation3], 1
    %423 = vsyncpa %s422, 1
    %424 = vsyncpa [#allocation6], 1
    %s425 = scalar_lea.sflag [#allocation6], 1
    %426 = vsyncpa %s425, 1
    %427 = vsyncpa [#allocation9], 1
    %s428 = scalar_lea.sflag [#allocation9], 1
    %429 = vsyncpa %s428, 1
    %430 = vsyncpa [#allocation4], 1
    %s431 = scalar_lea.sflag [#allocation4], 1
    %432 = vsyncpa %s431, 1

</llo_original>
